<compile_context>
chip_gen: v7x
topology: tpu7x:2x2x1
jax: 0.10.0
libtpu: 0.0.40
codegen_flags: <defaults>
</compile_context>

<pallas_src>
import functools

import jax
import jax.numpy as jnp
from jax.experimental import pallas as pl
from jax.experimental.pallas import tpu as pltpu


def _accumulate(x_ref, acc_ref, *, n_chunks, masked, valid):
    """acc_ref (tile_r,128) += f32 sum of 128-lane chunks of x_ref (tile_r,tile_k).

    `valid` (static) is the number of valid columns in this block. Chunks entirely
    past `valid` are skipped, the single straddling chunk is masked, the rest are
    plain adds (pure VPU work).
    """
    partial = None
    for c in range(n_chunks):
        lo = c * 128
        if masked and lo >= valid:
            break  # this chunk (and all later ones) is pure padding
        xs = x_ref[:, lo:lo + 128].astype(jnp.float32)
        if masked and lo + 128 > valid:
            col = jax.lax.broadcasted_iota(jnp.int32, xs.shape, 1)
            xs = jnp.where(col < (valid - lo), xs, 0.0)
        partial = xs if partial is None else partial + xs
    if partial is not None:
        acc_ref[...] += partial


def _gap_kernel(x_ref, o_ref, acc_ref, *, hw, tile_k, nk):
    # x_ref:   (tile_r, tile_k) input tile
    # o_ref:   (tile_r, 1)      output tile (resident across the k axis)
    # acc_ref: (tile_r, 128)    lane-dense f32 accumulator scratch
    k = pl.program_id(1)
    n_chunks = tile_k // 128
    valid_last = hw - (nk - 1) * tile_k  # static, in (0, tile_k]

    @pl.when(k == 0)
    def _():
        acc_ref[...] = jnp.zeros_like(acc_ref)

    if valid_last == tile_k:
        # tile_k divides H*W: every block is fully valid; never mask.
        _accumulate(x_ref, acc_ref, n_chunks=n_chunks, masked=False, valid=tile_k)
    elif nk == 1:
        _accumulate(x_ref, acc_ref, n_chunks=n_chunks, masked=True, valid=valid_last)
    else:
        @pl.when(k < nk - 1)
        def _():
            _accumulate(x_ref, acc_ref, n_chunks=n_chunks, masked=False, valid=tile_k)

        @pl.when(k == nk - 1)
        def _():
            _accumulate(x_ref, acc_ref, n_chunks=n_chunks, masked=True,
                        valid=valid_last)

    @pl.when(k == nk - 1)
    def _():
        total = jnp.sum(acc_ref[...], axis=-1, keepdims=True)
        o_ref[...] = (total * (1.0 / hw)).astype(o_ref.dtype)


def _round_up(a, b):
    return (a + b - 1) // b * b


def _round_down(a, b):
    return a // b * b


def _tpu_kind():
    try:
        return jax.devices()[0].device_kind.lower()
    except Exception:
        return ""


def global_avg_pool(x, keep_dim: bool = False):
    """Equivalent of F.adaptive_avg_pool2d(x, 1) (+ optional flatten) for NCHW input."""
    N, C, H, W = x.shape
    NC, HW = N * C, H * W
    x2d = x.reshape(NC, HW)

    itemsize = jnp.dtype(x.dtype).itemsize
    sublane = 8 * max(1, 4 // itemsize)  # f32: 8, bf16: 16, int8/fp8: 32

    kind = _tpu_kind()
    is_v7 = "v7" in kind
    # Per-input-buffer byte budget: ~4 MiB fits v5e's tighter scoped-VMEM situation
    # (double-buffered input + scratch + output buffers); v6e/v7x get ~8 MiB.
    budget = (8 if ("v6" in kind or is_v7) else 4) * 1024 * 1024

    hw_pad = _round_up(HW, 128)
    nc_pad = _round_up(NC, sublane)

    max_tile_k = 8192   # bounds the unrolled 128-lane chunk loop (<= 64 chunks)
    max_tile_r = 4096   # bounds the (tile_r,128) f32 scratch / (tile_r,1) out buffers

    # Reduction tile: cover the whole (padded) H*W when it fits the budget at a
    # baseline row count, otherwise cap; then grow the row tile to fill the budget
    # (this is what rescues small-HW shapes like 49/196/784 from 128-KiB blocks).
    base_rows = max(sublane, min(nc_pad, 256))
    tile_k = min(hw_pad, max_tile_k,
                 max(128, _round_down(budget // (base_rows * itemsize), 128)))
    tile_r = max(sublane, min(nc_pad, max_tile_r,
                              _round_down(budget // (tile_k * itemsize), sublane)))

    # v7x has 2 TensorCores: guarantee the "parallel" row axis has >= 2 blocks so
    # both cores get work (no effect on single-TC v5e/v6e).
    if is_v7 and tile_r >= nc_pad and nc_pad >= 2 * sublane:
        tile_r = _round_up(pl.cdiv(nc_pad, 2), sublane)

    grid = (pl.cdiv(NC, tile_r), pl.cdiv(HW, tile_k))
    nk = grid[1]

    kernel = functools.partial(_gap_kernel, hw=HW, tile_k=tile_k, nk=nk)

    out = pl.pallas_call(
        kernel,
        out_shape=jax.ShapeDtypeStruct((NC, 1), x.dtype),
        grid_spec=pltpu.PrefetchScalarGridSpec(
            num_scalar_prefetch=0,
            grid=grid,
            in_specs=[pl.BlockSpec((tile_r, tile_k), lambda r, k: (r, k))],
            out_specs=pl.BlockSpec((tile_r, 1), lambda r, k: (r, 0)),
            scratch_shapes=[pltpu.VMEM((tile_r, 128), jnp.float32)],
        ),
        compiler_params=pltpu.CompilerParams(
            # rows parallel (shards across v7x's 2 TCs), reduction axis arbitrary+last
            dimension_semantics=("parallel", "arbitrary"),
            # equal to the v6e/v7x scoped default; raises v5e's 16 MiB default so the
            # 4 MiB-budget tiles + scratch + output buffers always fit.
            vmem_limit_bytes=32 * 1024 * 1024,
        ),
        cost_estimate=pl.CostEstimate(
            flops=NC * HW,
            transcendentals=0,
            bytes_accessed=NC * HW * itemsize + NC * itemsize,
        ),
    )(x2d)

    out = out.reshape(N, C)
    if keep_dim:
        return out.reshape(N, C, 1, 1)
    return out  # (N, C), matching x.view(x.size(0), -1)


if __name__ == "__main__":
    key = jax.random.PRNGKey(0)
    N, C, H, W = 2, 4, 16, 16
    x = jax.random.normal(key, (N, C, H, W), dtype=jnp.float32)

    # keep_dim=False (module default): output shape (N, C)
    y = jax.block_until_ready(global_avg_pool(x, keep_dim=False))
    # keep_dim=True: output shape (N, C, 1, 1)
    y_keep = jax.block_until_ready(global_avg_pool(x, keep_dim=True))

    ref = jnp.mean(x, axis=(2, 3))
    assert y.shape == (N, C)
    assert y_keep.shape == (N, C, 1, 1)
    assert jnp.allclose(y, ref, atol=1e-5)
    assert jnp.allclose(y_keep.reshape(N, C), ref, atol=1e-5)

    # Second small shape with H*W not a multiple of 128 to exercise the masked
    # last-block path (mask only on the straddling 128-lane chunk).
    x2 = jax.random.normal(jax.random.PRNGKey(1), (2, 4, 7, 7), dtype=jnp.float32)
    y2 = jax.block_until_ready(global_avg_pool(x2))
    assert y2.shape == (2, 4)
    assert jnp.allclose(y2, jnp.mean(x2, axis=(2, 3)), atol=1e-5)

    print("KERNEL_OK")
</pallas_src>

<mosaic_0001>
module attributes {stable_mosaic.version = 11 : i64} {
  func.func @_gap_kernel(%arg0: i32, %arg1: i32, %arg2: memref<8x256xf32, #tpu.memory_space<vmem>>, %arg3: memref<8x1xf32, #tpu.memory_space<vmem>>, %arg4: memref<8x128xf32, #tpu.memory_space<vmem>>) attributes {dimension_semantics = [#tpu.dimension_semantics<parallel>, #tpu.dimension_semantics<arbitrary>], iteration_bounds = array<i64: 1, 1>, scalar_prefetch = 0 : i64, scratch_operands = 1 : i64, tpu.core_type = #tpu.core_type<tc>, window_params = [{transform_indices = @transform_0, window_bounds = array<i64: 8, 256>}, {transform_indices = @transform_1, window_bounds = array<i64: 8, 1>}]} {
    %c0_i32 = arith.constant 0 : i32
    %0 = arith.cmpi eq, %arg1, %c0_i32 : i32
    %1 = arith.extui %0 : i1 to i32
    %c0_i32_0 = arith.constant 0 : i32
    %2 = arith.cmpi ne, %1, %c0_i32_0 : i32
    scf.if %2 {
      %cst = arith.constant 0.000000e+00 : f32
      %12 = vector.broadcast %cst : f32 to vector<8x128xf32>
      %c0_9 = arith.constant 0 : index
      %c0_10 = arith.constant 0 : index
      %13 = vector.load %arg4[%c0_9, %c0_10] : memref<8x128xf32, #tpu.memory_space<vmem>>, vector<8x128xf32>
      tpu.vector_store %arg4[%c0_9, %c0_10], %12 {strides = array<i32>} : memref<8x128xf32, #tpu.memory_space<vmem>>, vector<8x128xf32>,
    } else {
    }
    %c0 = arith.constant 0 : index
    %c0_1 = arith.constant 0 : index
    %3 = vector.load %arg2[%c0, %c0_1] : memref<8x256xf32, #tpu.memory_space<vmem>>, vector<8x128xf32>
    %c0_2 = arith.constant 0 : index
    %c128 = arith.constant 128 : index
    %4 = vector.load %arg2[%c0_2, %c128] : memref<8x256xf32, #tpu.memory_space<vmem>>, vector<8x128xf32>
    %5 = arith.addf %3, %4 : vector<8x128xf32>
    %c0_3 = arith.constant 0 : index
    %c0_4 = arith.constant 0 : index
    %6 = vector.load %arg4[%c0_3, %c0_4] : memref<8x128xf32, #tpu.memory_space<vmem>>, vector<8x128xf32>
    %7 = arith.addf %6, %5 : vector<8x128xf32>
    %c0_5 = arith.constant 0 : index
    %c0_6 = arith.constant 0 : index
    %8 = vector.load %arg4[%c0_5, %c0_6] : memref<8x128xf32, #tpu.memory_space<vmem>>, vector<8x128xf32>
    tpu.vector_store %arg4[%c0_5, %c0_6], %7 {strides = array<i32>} : memref<8x128xf32, #tpu.memory_space<vmem>>, vector<8x128xf32>,
    %c0_i32_7 = arith.constant 0 : i32
    %9 = arith.cmpi eq, %arg1, %c0_i32_7 : i32
    %10 = arith.extui %9 : i1 to i32
    %c0_i32_8 = arith.constant 0 : i32
    %11 = arith.cmpi ne, %10, %c0_i32_8 : i32
    scf.if %11 {
      %c0_9 = arith.constant 0 : index
      %c0_10 = arith.constant 0 : index
      %12 = vector.load %arg4[%c0_9, %c0_10] : memref<8x128xf32, #tpu.memory_space<vmem>>, vector<8x128xf32>
      %cst = arith.constant dense<0.000000e+00> : vector<8xf32>
      %13 = vector.multi_reduction <add>, %12, %cst [1] : vector<8x128xf32> to vector<8xf32>
      %14 = vector.shape_cast %13 : vector<8xf32> to vector<8x1xf32>
      %cst_11 = arith.constant 3.906250e-03 : f32
      %15 = vector.broadcast %cst_11 : f32 to vector<8x1xf32>
      %16 = arith.mulf %14, %15 : vector<8x1xf32>
      %c0_12 = arith.constant 0 : index
      %c0_13 = arith.constant 0 : index
      %17 = vector.load %arg3[%c0_12, %c0_13] : memref<8x1xf32, #tpu.memory_space<vmem>>, vector<8x1xf32>
      tpu.vector_store %arg3[%c0_12, %c0_13], %16 {strides = array<i32>} : memref<8x1xf32, #tpu.memory_space<vmem>>, vector<8x1xf32>,
    } else {
    }
    return
  }
  func.func @transform_0(%arg0: i32, %arg1: i32) -> (i32, i32) {
    %c0_i32 = arith.constant 0 : i32
    return %arg0, %arg1 : i32, i32
  }
  func.func @transform_1(%arg0: i32, %arg1: i32) -> (i32, i32) {
    %c0_i32 = arith.constant 0 : i32
    %c0_i32_0 = arith.constant 0 : i32
    return %arg0, %c0_i32 : i32, i32
  }
}

</mosaic_0001>

<llo_original>
// kernel: tpu_custom_call.1
$region0: #{tpu_custom_call.1}
  #allocation0 [shape = 'u32[]', space=smem, size = 0x4, offset = 0x4, fixed_abs, tag = 'smem constant byte address 0x4 - core index']
  #allocation1 [shape = 'u32[144,128]{1,0:T(1,128)}', space=vmem, size = 0x12000, scoped, tag = 'internal scratch']
  #allocation2 [shape = 'f32[8,128]{1,0:T(8,128)}', space=vmem, size = 0x1000, scoped, tag = 'scratch operand']
  %s0 = inlined_call_operand.hbm [shape: f32[8,256], index: 0, kind: input, shape index: {}]
  %s1 = inlined_call_operand.vmem [shape: f32[8,1], index: 1, kind: output, shape index: {}]
  %s2 = sld [smem:[#allocation0]]
  $region26: #{tpu_custom_call.1} parent=0
    _
  %s4 = ssub.s32 1, %s2
  %s5 = scalar_select 0, %s4, %s2
  $region1: #{tpu_custom_call.1} parent=0
    #allocation3 [shape = 'u8[8192]{0}', space=vmem, size = 0x2000, scoped, tag = 'input window, operand 0, single buffered']
    #allocation4 [shape = 's32[1]{0}', space=sflag, size = 0x4, scoped, tag = 'scoped memory for tpu_custom_call.1']
    %6 = vsyncpa [#allocation4], 0
    // Predicated region
    $region2: #{tpu_custom_call.1} parent=1 // pred_check
      _
    $region3: #{tpu_custom_call.1} parent=1 // pred_check_branch
      %8 = sbr.rel (0) target = $region5
    $region4: #{tpu_custom_call.1} parent=1 // pred_region
      %s10 = ssub.s32 256, 256
      %11 = vsyncadd [#allocation4], %s10
      %s13 = sshll.u32 [#allocation3], 4
      %s14 = int_to_ptr.vmem [resolvable:$true] %s13
      %16 = dma.hbm_to_vmem [thread:$0]  %s0, 256, %s14, [#allocation4]
    $region5: #{tpu_custom_call.1} parent=1 // pred_fallthru
      _
    // Predicated region
    $region6: #{tpu_custom_call.1} parent=1 // pred_check
      _
    $region7: #{tpu_custom_call.1} parent=1 // pred_check_branch
      %18 = sbr.rel (0) target = $region9
    $region8: #{tpu_custom_call.1} parent=1 // pred_region
      %19 = dma.done [#allocation4], 256
    $region9: #{tpu_custom_call.1} parent=1 // pred_fallthru
      _
    %p20 = scmp.eq.s32.totalorder 0, 0
    // Predicated region
    $region10: #{tpu_custom_call.1} parent=1 // pred_check
      %p21 = pneg %p20
    $region11: #{tpu_custom_call.1} parent=1 // pred_check_branch
      %23 = sbr.rel (%p21) target = $region13
    $region12: #{tpu_custom_call.1} parent=1 // pred_region
      %24 = vst [vmem:[#allocation2] sm:$0xff] 0.0
    $region13: #{tpu_custom_call.1} parent=1 // pred_fallthru
      _
    %v25 = vld [vmem:[#allocation3] sm:$0xff]
    %v26 = vld [vmem:[#allocation3 + $0x8] sm:$0xff]
    %v27 = vadd.f32 %v25, %v26
    %v28 = vld [vmem:[#allocation2] sm:$0xff]
    %v29 = vadd.f32 %v28, %v27
    %30 = vst [vmem:[#allocation2] sm:$0xff] %v29
    // Predicated region
    $region14: #{tpu_custom_call.1} parent=1 // pred_check
      %p31 = pneg %p20
    $region15: #{tpu_custom_call.1} parent=1 // pred_check_branch
      %33 = sbr.rel (%p31) target = $region17
    $region16: #{tpu_custom_call.1} parent=1 // pred_region
      %v34 = vld [vmem:[#allocation2] sm:$0xff]
      %35 = vadd.xlane.f32.xlu0 %v34
      %v36 = vpop.xlane.xlu0 %35
      %v37 = vmul.f32 %v36, 0.00390625
      %vm38 = vcmask 7168
      %39 = vst.msk [vmem:[%s1] sm:$0xff] %vm38, %v37
    $region17: #{tpu_custom_call.1} parent=1 // pred_fallthru
      _
    // Predicated region
    $region18: #{tpu_custom_call.1} parent=1 // pred_check
      _
    $region19: #{tpu_custom_call.1} parent=1 // pred_check_branch
      %41 = sbr.rel (0) target = $region21
    $region20: #{tpu_custom_call.1} parent=1 // pred_region
      _
    $region21: #{tpu_custom_call.1} parent=1 // pred_fallthru
      _
    // Predicated region
    $region22: #{tpu_custom_call.1} parent=1 // pred_check
      _
    $region23: #{tpu_custom_call.1} parent=1 // pred_check_branch
      %43 = sbr.rel (0) target = $region25
    $region24: #{tpu_custom_call.1} parent=1 // pred_region
      _
    $region25: #{tpu_custom_call.1} parent=1 // pred_fallthru
      _
    %44 = vsyncpa [#allocation4], 1

</llo_original>
